<compile_context>
chip_gen: v7x
topology: tpu7x:2x2x1
jax: 0.10.0
libtpu: 0.0.40
codegen_flags: <defaults>
</compile_context>

<pallas_src>
import functools

import jax
import jax.numpy as jnp
from jax.experimental import pallas as pl
from jax.experimental.pallas import tpu as pltpu


def _round_up(a, b):
    return (a + b - 1) // b * b


def _cdiv(a, b):
    return (a + b - 1) // b


# --------------------------------------------------------------------------- #
# Kernel
# --------------------------------------------------------------------------- #
def _ffm_kernel(x_ref, gamma_ref, beta_ref, w1_ref, b1_ref, w2_ref, b2_ref,
                o_ref, xn_ref, acc_ref, *, eps):
    hk = pl.program_id(1)

    @pl.when(hk == 0)
    def _():
        # ---- LayerNorm over last dim (biased var, eps inside rsqrt), f32 stats.
        x = x_ref[...].astype(jnp.float32)              # (TM, D)
        mean = jnp.mean(x, axis=-1, keepdims=True)
        xc = x - mean
        var = jnp.mean(xc * xc, axis=-1, keepdims=True)
        xn = xc * jax.lax.rsqrt(var + eps)
        xn = xn * gamma_ref[...] + beta_ref[...]        # gamma/beta are f32 already
        xn_ref[...] = xn.astype(xn_ref.dtype)           # cache in MXU dtype
        acc_ref[...] = jnp.zeros_like(acc_ref)

    # ---- Linear 1 chunk (D -> tile_h): MXU matmul, f32 accumulation.
    h = jnp.dot(xn_ref[...], w1_ref[...], preferred_element_type=jnp.float32)
    h = h + b1_ref[...]
    h = h * jax.nn.sigmoid(h)                           # SiLU; Dropout(p=0) = identity

    # ---- Linear 2 chunk (tile_h -> D), accumulate into f32 scratch.
    acc_ref[...] += jnp.dot(h.astype(w2_ref.dtype), w2_ref[...],
                            preferred_element_type=jnp.float32)

    @pl.when(hk == pl.num_programs(1) - 1)
    def _():
        o_ref[...] = (acc_ref[...] + b2_ref[...]).astype(o_ref.dtype)


# --------------------------------------------------------------------------- #
# Tiling / VMEM accounting
# --------------------------------------------------------------------------- #
def _vmem_footprint(tm, th, d, x_bytes, w_bytes, mxu_bytes, chunked):
    """Estimated VMEM bytes for one pipeline configuration."""
    bc_w = 2 if chunked else 1                 # weight chunks double-buffer when streamed
    nbuf_x = 3 if d <= 256 else 2              # deeper x buffering in the mem-bound regime
    fixed = bc_w * ((d * th + th * d) * w_bytes + th * 4) + 3 * d * 4
    stream = (nbuf_x + 2) * tm * d * x_bytes   # x tiles + (2x) out tiles
    scratch = tm * d * (mxu_bytes + 4)         # xn cache + f32 accumulator
    live = 3 * tm * th * 4 + 5 * tm * d * 4    # h / SiLU / cast copy + LN temporaries
    return fixed + stream + scratch + live


def _select_tiling(n, d, h, x_bytes, w_bytes, mxu_bytes, budget):
    """Pick (tile_m, tile_h): prefer full-H weight residency with a large token
    tile; otherwise chunk H (weight streaming) to keep tile_m large."""
    cap_m = _round_up(max(n, 8), 8)
    th_options = [h]                                     # full residency first
    for c in (4096, 2048, 1024, 512, 256, 128):          # 128-multiples only
        if c < h:
            th_options.append(c)
    tm_options = (1024, 512, 384, 256, 192, 128, 96, 64, 32, 16, 8)

    best = None
    for th in th_options:
        chunked = th < h
        for tm in tm_options:
            tm_c = min(tm, cap_m)
            if _vmem_footprint(tm_c, th, d, x_bytes, w_bytes,
                               mxu_bytes, chunked) <= budget:
                if tm_c >= min(128, cap_m):
                    return tm_c, th
                if best is None or tm_c > best[0]:
                    best = (tm_c, th)
                break
    if best is not None:
        return best
    return min(8, cap_m), min(th_options[-1], h)


# --------------------------------------------------------------------------- #
# Wrapper
# --------------------------------------------------------------------------- #
def feed_forward_module(x, params, *, eps=1e-5, mxu_dtype=jnp.bfloat16,
                        tile_m=None, tile_h=None, vmem_budget_bytes=None):
    """x: (B, T, D) -> (B, T, D).  params: gamma, beta, w1, b1, w2, b2."""
    B, T, D = x.shape
    H = params["w1"].shape[1]
    N = B * T

    # Per-generation VMEM budget / limit (v5e/v6e: 128 MiB, v7x: 64 MiB per TC).
    try:
        vmem_cap = int(pltpu.get_tpu_info().vmem_capacity_bytes)
    except Exception:
        vmem_cap = 64 * 1024 * 1024            # conservative (v7x) fallback
    if vmem_budget_bytes is None:
        vmem_budget_bytes = int(vmem_cap * 0.72)

    x_bytes = jnp.dtype(x.dtype).itemsize
    mxu_bytes = jnp.dtype(mxu_dtype).itemsize
    w_bytes = mxu_bytes
    cap_m = _round_up(max(N, 8), 8)

    sel_m, sel_h = _select_tiling(N, D, H, x_bytes, w_bytes, mxu_bytes,
                                  vmem_budget_bytes)
    tile_m = sel_m if tile_m is None else min(_round_up(tile_m, 8), cap_m)
    tile_h = sel_h if tile_h is None else tile_h

    # Ensure >=2 token-grid steps so v7x's two TensorCores both get work.
    if N >= 16:
        tile_m = min(tile_m, _round_up(_cdiv(N, 2), 8))

    N_pad = _round_up(N, tile_m)
    chunked = tile_h < H
    H_pad = _round_up(H, tile_h) if chunked else H
    n_m = N_pad // tile_m
    n_h = H_pad // tile_h

    # ---- prepare operands -------------------------------------------------- #
    x2 = x.reshape(N, D)
    if N_pad != N:
        x2 = jnp.pad(x2, ((0, N_pad - N), (0, 0)))       # zero rows are benign

    # Small per-feature params: pre-cast to f32 once (no per-step casts).
    gamma = params["gamma"].reshape(1, D).astype(jnp.float32)
    beta = params["beta"].reshape(1, D).astype(jnp.float32)
    b1 = params["b1"].reshape(1, H).astype(jnp.float32)
    b2 = params["b2"].reshape(1, D).astype(jnp.float32)
    # MXU operands in the narrow dtype; accumulation stays f32 in the kernel.
    w1 = params["w1"].astype(mxu_dtype)                   # (D, H)
    w2 = params["w2"].astype(mxu_dtype)                   # (H, D)
    if H_pad != H:
        w1 = jnp.pad(w1, ((0, 0), (0, H_pad - H)))
        b1 = jnp.pad(b1, ((0, 0), (0, H_pad - H)))
        w2 = jnp.pad(w2, ((0, H_pad - H), (0, 0)))        # zero chunks contribute 0

    # ---- BlockSpecs --------------------------------------------------------- #
    def spec(shape, imap, mode=None):
        if mode is None:
            return pl.BlockSpec(shape, imap)
        return pl.BlockSpec(shape, imap, pipeline_mode=mode)

    const1 = pl.Buffered(1)                      # single-buffer constant-index blocks
    w_mode = const1 if n_h == 1 else None        # stream (double-buffer) when chunked
    x_mode = pl.Buffered(3) if (D <= 256 and n_m >= 3) else None

    in_specs = [
        spec((tile_m, D), lambda i, k: (i, 0), x_mode),        # x tile (streamed)
        spec((1, D), lambda i, k: (0, 0), const1),             # gamma (resident)
        spec((1, D), lambda i, k: (0, 0), const1),             # beta
        spec((D, tile_h), lambda i, k: (0, k), w_mode),        # w1 chunk
        spec((1, tile_h), lambda i, k: (0, k), w_mode),        # b1 chunk
        spec((tile_h, D), lambda i, k: (k, 0), w_mode),        # w2 chunk
        spec((1, D), lambda i, k: (0, 0), const1),             # b2
    ]
    out_spec = pl.BlockSpec((tile_m, D), lambda i, k: (i, 0))

    vmem_est = _vmem_footprint(tile_m, tile_h, D, x_bytes, w_bytes,
                               mxu_bytes, chunked)
    # Leave explicit headroom below physical VMEM (>=16 MiB for compiler scratch).
    vmem_limit = int(min(max(int(vmem_est * 1.25), 32 * 1024 * 1024),
                         vmem_cap - 16 * 1024 * 1024))

    cost = pl.CostEstimate(
        flops=4 * N_pad * D * H_pad + 10 * N_pad * D,
        transcendentals=N_pad * (H_pad + 1),
        bytes_accessed=(2 * N_pad * D * x_bytes
                        + (n_m if chunked else 1) * 2 * D * H_pad * w_bytes
                        + (H_pad + 3 * D) * 4),
    )

    out = pl.pallas_call(
        functools.partial(_ffm_kernel, eps=eps),
        out_shape=jax.ShapeDtypeStruct((N_pad, D), x.dtype),
        grid_spec=pltpu.PrefetchScalarGridSpec(
            num_scalar_prefetch=0,
            grid=(n_m, n_h),
            in_specs=in_specs,
            out_specs=out_spec,
            scratch_shapes=[pltpu.VMEM((tile_m, D), mxu_dtype),    # cached LN output
                            pltpu.VMEM((tile_m, D), jnp.float32)], # f32 accumulator
        ),
        compiler_params=pltpu.CompilerParams(
            dimension_semantics=("parallel", "arbitrary"),
            vmem_limit_bytes=vmem_limit),
        cost_estimate=cost,
    )(x2, gamma, beta, w1, b1, w2, b2)

    if N_pad != N:
        out = out[:N]
    return out.reshape(B, T, D)


# --------------------------------------------------------------------------- #
# Params / reference
# --------------------------------------------------------------------------- #
def init_params(key, dim, mult=4, dtype=jnp.float32):
    """Matches nn.LayerNorm / nn.Linear shapes and default init."""
    hidden = dim * mult
    k1, k2, k3, k4 = jax.random.split(key, 4)
    lim1 = 1.0 / (dim ** 0.5)
    lim2 = 1.0 / (hidden ** 0.5)
    return {
        "gamma": jnp.ones((dim,), dtype),
        "beta": jnp.zeros((dim,), dtype),
        "w1": jax.random.uniform(k1, (dim, hidden), dtype, -lim1, lim1),
        "b1": jax.random.uniform(k2, (hidden,), dtype, -lim1, lim1),
        "w2": jax.random.uniform(k3, (hidden, dim), dtype, -lim2, lim2),
        "b2": jax.random.uniform(k4, (dim,), dtype, -lim2, lim2),
    }


def _reference(x, p, eps=1e-5):
    mean = jnp.mean(x, axis=-1, keepdims=True)
    var = jnp.mean((x - mean) ** 2, axis=-1, keepdims=True)
    xn = (x - mean) / jnp.sqrt(var + eps) * p["gamma"] + p["beta"]
    h = xn @ p["w1"] + p["b1"]
    h = h * jax.nn.sigmoid(h)
    return h @ p["w2"] + p["b2"]


if __name__ == "__main__":
    key = jax.random.PRNGKey(0)
    kx, kp = jax.random.split(key)

    # Lane-dense config: D is a multiple of 128 so stores are full vst.
    B, T, D, MULT = 2, 16, 128, 4                 # hidden = 512
    x = jax.random.normal(kx, (B, T, D), dtype=jnp.float32)
    params = init_params(kp, D, MULT)
    y_ref = _reference(x, params)

    # Default path: bf16 MXU operands, f32 accumulation / LN / epilogue.
    y = jax.block_until_ready(feed_forward_module(x, params))
    assert y.shape == x.shape
    assert jnp.allclose(y, y_ref, atol=5e-2, rtol=5e-2), "mismatch (bf16 MXU path)"

    # Full-f32 MXU path matches the PyTorch-semantics reference tightly.
    y32 = jax.block_until_ready(
        feed_forward_module(x, params, mxu_dtype=jnp.float32))
    assert jnp.allclose(y32, y_ref, atol=2e-3, rtol=2e-3), "mismatch (f32 path)"

    # Ragged token count exercises pad-to-tile + >=2-grid-step path.
    x2 = jax.random.normal(kx, (2, 13, D), dtype=jnp.float32)
    y2 = jax.block_until_ready(feed_forward_module(x2, params))
    y2_ref = _reference(x2, params)
    assert y2.shape == x2.shape
    assert jnp.allclose(y2, y2_ref, atol=5e-2, rtol=5e-2), "mismatch (padded path)"

    # Forced H-chunking exercises the weight-streaming accumulator path.
    y3 = jax.block_until_ready(feed_forward_module(x, params, tile_h=128))
    assert jnp.allclose(y3, y_ref, atol=5e-2, rtol=5e-2), "mismatch (H-chunked path)"

    print("KERNEL_OK")
</pallas_src>

<mosaic_0001>
module attributes {stable_mosaic.version = 11 : i64} {
  func.func @_ffm_kernel(%arg0: i32, %arg1: i32, %arg2: memref<16x128xf32, #tpu.memory_space<vmem>>, %arg3: memref<1x128xf32, #tpu.memory_space<vmem>>, %arg4: memref<1x128xf32, #tpu.memory_space<vmem>>, %arg5: memref<128x512xbf16, #tpu.memory_space<vmem>>, %arg6: memref<1x512xf32, #tpu.memory_space<vmem>>, %arg7: memref<512x128xbf16, #tpu.memory_space<vmem>>, %arg8: memref<1x128xf32, #tpu.memory_space<vmem>>, %arg9: memref<16x128xf32, #tpu.memory_space<vmem>>, %arg10: memref<16x128xbf16, #tpu.memory_space<vmem>>, %arg11: memref<16x128xf32, #tpu.memory_space<vmem>>) attributes {dimension_semantics = [#tpu.dimension_semantics<parallel>, #tpu.dimension_semantics<arbitrary>], iteration_bounds = array<i64: 2, 1>, scalar_prefetch = 0 : i64, scratch_operands = 2 : i64, tpu.core_type = #tpu.core_type<tc>, window_params = [{transform_indices = @transform_0, window_bounds = array<i64: 16, 128>}, {pipeline_mode = #tpu.pipeline_mode<synchronous>, transform_indices = @transform_1, window_bounds = array<i64: 1, 128>}, {pipeline_mode = #tpu.pipeline_mode<synchronous>, transform_indices = @transform_2, window_bounds = array<i64: 1, 128>}, {pipeline_mode = #tpu.pipeline_mode<synchronous>, transform_indices = @transform_3, window_bounds = array<i64: 128, 512>}, {pipeline_mode = #tpu.pipeline_mode<synchronous>, transform_indices = @transform_4, window_bounds = array<i64: 1, 512>}, {pipeline_mode = #tpu.pipeline_mode<synchronous>, transform_indices = @transform_5, window_bounds = array<i64: 512, 128>}, {pipeline_mode = #tpu.pipeline_mode<synchronous>, transform_indices = @transform_6, window_bounds = array<i64: 1, 128>}, {transform_indices = @transform_7, window_bounds = array<i64: 16, 128>}]} {
    %c0_i32 = arith.constant 0 : i32
    %0 = arith.cmpi eq, %arg1, %c0_i32 : i32
    %1 = arith.extui %0 : i1 to i32
    %c0_i32_0 = arith.constant 0 : i32
    %2 = arith.cmpi ne, %1, %c0_i32_0 : i32
    scf.if %2 {
      %c0_16 = arith.constant 0 : index
      %c0_17 = arith.constant 0 : index
      %24 = vector.load %arg2[%c0_16, %c0_17] : memref<16x128xf32, #tpu.memory_space<vmem>>, vector<16x128xf32>
      %cst_18 = arith.constant dense<0.000000e+00> : vector<16xf32>
      %25 = vector.multi_reduction <add>, %24, %cst_18 [1] : vector<16x128xf32> to vector<16xf32>
      %26 = vector.shape_cast %25 : vector<16xf32> to vector<16x1xf32>
      %cst_19 = arith.constant 1.280000e+02 : f32
      %27 = vector.broadcast %cst_19 : f32 to vector<16x1xf32>
      %28 = arith.divf %26, %27 : vector<16x1xf32>
      %29 = vector.broadcast %28 : vector<16x1xf32> to vector<16x128xf32>
      %30 = arith.subf %24, %29 : vector<16x128xf32>
      %31 = arith.mulf %30, %30 : vector<16x128xf32>
      %cst_20 = arith.constant dense<0.000000e+00> : vector<16xf32>
      %32 = vector.multi_reduction <add>, %31, %cst_20 [1] : vector<16x128xf32> to vector<16xf32>
      %33 = vector.shape_cast %32 : vector<16xf32> to vector<16x1xf32>
      %cst_21 = arith.constant 1.280000e+02 : f32
      %34 = vector.broadcast %cst_21 : f32 to vector<16x1xf32>
      %35 = arith.divf %33, %34 : vector<16x1xf32>
      %cst_22 = arith.constant 9.99999974E-6 : f32
      %36 = vector.broadcast %cst_22 : f32 to vector<16x1xf32>
      %37 = arith.addf %35, %36 : vector<16x1xf32>
      %38 = math.rsqrt %37 : vector<16x1xf32>
      %39 = vector.broadcast %38 : vector<16x1xf32> to vector<16x128xf32>
      %40 = arith.mulf %30, %39 : vector<16x128xf32>
      %c0_23 = arith.constant 0 : index
      %c0_24 = arith.constant 0 : index
      %41 = vector.load %arg3[%c0_23, %c0_24] : memref<1x128xf32, #tpu.memory_space<vmem>>, vector<1x128xf32>
      %42 = vector.broadcast %41 : vector<1x128xf32> to vector<16x128xf32>
      %43 = arith.mulf %40, %42 : vector<16x128xf32>
      %c0_25 = arith.constant 0 : index
      %c0_26 = arith.constant 0 : index
      %44 = vector.load %arg4[%c0_25, %c0_26] : memref<1x128xf32, #tpu.memory_space<vmem>>, vector<1x128xf32>
      %45 = vector.broadcast %44 : vector<1x128xf32> to vector<16x128xf32>
      %46 = arith.addf %43, %45 : vector<16x128xf32>
      %47 = arith.truncf %46 : vector<16x128xf32> to vector<16x128xbf16>
      %c0_27 = arith.constant 0 : index
      %c0_28 = arith.constant 0 : index
      %48 = vector.load %arg10[%c0_27, %c0_28] : memref<16x128xbf16, #tpu.memory_space<vmem>>, vector<16x128xbf16>
      tpu.vector_store %arg10[%c0_27, %c0_28], %47 {strides = array<i32>} : memref<16x128xbf16, #tpu.memory_space<vmem>>, vector<16x128xbf16>,
      %cst_29 = arith.constant 0.000000e+00 : f32
      %49 = vector.broadcast %cst_29 : f32 to vector<16x128xf32>
      %c0_30 = arith.constant 0 : index
      %c0_31 = arith.constant 0 : index
      %50 = vector.load %arg11[%c0_30, %c0_31] : memref<16x128xf32, #tpu.memory_space<vmem>>, vector<16x128xf32>
      tpu.vector_store %arg11[%c0_30, %c0_31], %49 {strides = array<i32>} : memref<16x128xf32, #tpu.memory_space<vmem>>, vector<16x128xf32>,
    } else {
    }
    %c0 = arith.constant 0 : index
    %c0_1 = arith.constant 0 : index
    %3 = vector.load %arg10[%c0, %c0_1] : memref<16x128xbf16, #tpu.memory_space<vmem>>, vector<16x128xbf16>
    %c0_2 = arith.constant 0 : index
    %c0_3 = arith.constant 0 : index
    %4 = vector.load %arg5[%c0_2, %c0_3] : memref<128x512xbf16, #tpu.memory_space<vmem>>, vector<128x512xbf16>
    %cst = arith.constant dense<0.000000e+00> : vector<16x512xf32>
    %5 = tpu.matmul %3, %4, %cst {dimension_numbers = #tpu.dot_dimension_numbers<[1], [0], [0], [1], [0, 0, 1, 1], [], []>} : vector<16x128xbf16>, vector<128x512xbf16>, vector<16x512xf32> -> vector<16x512xf32>
    %c0_4 = arith.constant 0 : index
    %c0_5 = arith.constant 0 : index
    %6 = vector.load %arg6[%c0_4, %c0_5] : memref<1x512xf32, #tpu.memory_space<vmem>>, vector<1x512xf32>
    %7 = vector.broadcast %6 : vector<1x512xf32> to vector<16x512xf32>
    %8 = arith.addf %5, %7 : vector<16x512xf32>
    %9 = arith.negf %8 : vector<16x512xf32>
    %10 = math.exp %9 : vector<16x512xf32>
    %cst_6 = arith.constant 1.000000e+00 : f32
    %11 = vector.broadcast %cst_6 : f32 to vector<16x512xf32>
    %12 = arith.addf %11, %10 : vector<16x512xf32>
    %13 = arith.divf %11, %12 : vector<16x512xf32>
    %14 = arith.mulf %8, %13 : vector<16x512xf32>
    %c0_7 = arith.constant 0 : index
    %c0_8 = arith.constant 0 : index
    %15 = vector.load %arg11[%c0_7, %c0_8] : memref<16x128xf32, #tpu.memory_space<vmem>>, vector<16x128xf32>
    %16 = arith.truncf %14 : vector<16x512xf32> to vector<16x512xbf16>
    %c0_9 = arith.constant 0 : index
    %c0_10 = arith.constant 0 : index
    %17 = vector.load %arg7[%c0_9, %c0_10] : memref<512x128xbf16, #tpu.memory_space<vmem>>, vector<512x128xbf16>
    %cst_11 = arith.constant dense<0.000000e+00> : vector<16x128xf32>
    %18 = tpu.matmul %16, %17, %cst_11 {dimension_numbers = #tpu.dot_dimension_numbers<[1], [0], [0], [1], [0, 0, 1, 1], [], []>} : vector<16x512xbf16>, vector<512x128xbf16>, vector<16x128xf32> -> vector<16x128xf32>
    %19 = arith.addf %15, %18 : vector<16x128xf32>
    %c0_12 = arith.constant 0 : index
    %c0_13 = arith.constant 0 : index
    %20 = vector.load %arg11[%c0_12, %c0_13] : memref<16x128xf32, #tpu.memory_space<vmem>>, vector<16x128xf32>
    tpu.vector_store %arg11[%c0_12, %c0_13], %19 {strides = array<i32>} : memref<16x128xf32, #tpu.memory_space<vmem>>, vector<16x128xf32>,
    %c0_i32_14 = arith.constant 0 : i32
    %21 = arith.cmpi eq, %arg1, %c0_i32_14 : i32
    %22 = arith.extui %21 : i1 to i32
    %c0_i32_15 = arith.constant 0 : i32
    %23 = arith.cmpi ne, %22, %c0_i32_15 : i32
    scf.if %23 {
      %c0_16 = arith.constant 0 : index
      %c0_17 = arith.constant 0 : index
      %24 = vector.load %arg11[%c0_16, %c0_17] : memref<16x128xf32, #tpu.memory_space<vmem>>, vector<16x128xf32>
      %c0_18 = arith.constant 0 : index
      %c0_19 = arith.constant 0 : index
      %25 = vector.load %arg8[%c0_18, %c0_19] : memref<1x128xf32, #tpu.memory_space<vmem>>, vector<1x128xf32>
      %26 = vector.broadcast %25 : vector<1x128xf32> to vector<16x128xf32>
      %27 = arith.addf %24, %26 : vector<16x128xf32>
      %c0_20 = arith.constant 0 : index
      %c0_21 = arith.constant 0 : index
      %28 = vector.load %arg9[%c0_20, %c0_21] : memref<16x128xf32, #tpu.memory_space<vmem>>, vector<16x128xf32>
      tpu.vector_store %arg9[%c0_20, %c0_21], %27 {strides = array<i32>} : memref<16x128xf32, #tpu.memory_space<vmem>>, vector<16x128xf32>,
    } else {
    }
    return
  }
  func.func @transform_0(%arg0: i32, %arg1: i32) -> (i32, i32) {
    %c0_i32 = arith.constant 0 : i32
    %c0_i32_0 = arith.constant 0 : i32
    return %arg0, %c0_i32 : i32, i32
  }
  func.func @transform_1(%arg0: i32, %arg1: i32) -> (i32, i32) {
    %c0_i32 = arith.constant 0 : i32
    %c0_i32_0 = arith.constant 0 : i32
    %c0_i32_1 = arith.constant 0 : i32
    return %c0_i32, %c0_i32_0 : i32, i32
  }
  func.func @transform_2(%arg0: i32, %arg1: i32) -> (i32, i32) {
    %c0_i32 = arith.constant 0 : i32
    %c0_i32_0 = arith.constant 0 : i32
    %c0_i32_1 = arith.constant 0 : i32
    return %c0_i32, %c0_i32_0 : i32, i32
  }
  func.func @transform_3(%arg0: i32, %arg1: i32) -> (i32, i32) {
    %c0_i32 = arith.constant 0 : i32
    %c0_i32_0 = arith.constant 0 : i32
    return %c0_i32, %arg1 : i32, i32
  }
  func.func @transform_4(%arg0: i32, %arg1: i32) -> (i32, i32) {
    %c0_i32 = arith.constant 0 : i32
    %c0_i32_0 = arith.constant 0 : i32
    return %c0_i32, %arg1 : i32, i32
  }
  func.func @transform_5(%arg0: i32, %arg1: i32) -> (i32, i32) {
    %c0_i32 = arith.constant 0 : i32
    %c0_i32_0 = arith.constant 0 : i32
    return %arg1, %c0_i32 : i32, i32
  }
  func.func @transform_6(%arg0: i32, %arg1: i32) -> (i32, i32) {
    %c0_i32 = arith.constant 0 : i32
    %c0_i32_0 = arith.constant 0 : i32
    %c0_i32_1 = arith.constant 0 : i32
    return %c0_i32, %c0_i32_0 : i32, i32
  }
  func.func @transform_7(%arg0: i32, %arg1: i32) -> (i32, i32) {
    %c0_i32 = arith.constant 0 : i32
    %c0_i32_0 = arith.constant 0 : i32
    return %arg0, %c0_i32 : i32, i32
  }
}

</mosaic_0001>

<llo_original>
// kernel: tpu_custom_call.1
$region0: #{tpu_custom_call.1}
  #allocation0 [shape = 'u32[]', space=smem, size = 0x4, offset = 0x4, fixed_abs, tag = 'smem constant byte address 0x4 - core index']
  #allocation1 [shape = 'u32[144,128]{1,0:T(1,128)}', space=vmem, size = 0x12000, scoped, tag = 'internal scratch']
  #allocation2 [shape = 'bf16[16,128]{1,0:T(16,128)(2,1)}', space=vmem, size = 0x1000, scoped, tag = 'scratch operand']
  #allocation3 [shape = 'f32[16,128]{1,0:T(8,128)}', space=vmem, size = 0x2000, scoped, tag = 'scratch operand']
  %s0 = inlined_call_operand.hbm [shape: f32[32,128], index: 0, kind: input, shape index: {}]
  %s1 = inlined_call_operand.vmem [shape: f32[1,128], index: 1, kind: input, shape index: {}]
  %s2 = inlined_call_operand.vmem [shape: f32[1,128], index: 2, kind: input, shape index: {}]
  %s3 = inlined_call_operand.hbm [shape: bf16[128,512], index: 3, kind: input, shape index: {}]
  %s4 = inlined_call_operand.vmem [shape: f32[1,512], index: 4, kind: input, shape index: {}]
  %s5 = inlined_call_operand.hbm [shape: bf16[512,128], index: 5, kind: input, shape index: {}]
  %s6 = inlined_call_operand.vmem [shape: f32[1,128], index: 6, kind: input, shape index: {}]
  %s7 = inlined_call_operand.hbm [shape: f32[32,128], index: 7, kind: output, shape index: {}]
  %s8 = sld [smem:[#allocation0]]
  $region81: #{tpu_custom_call.1} parent=0
    _
  %s10 = ssub.s32 1, %s8
  %s11 = scalar_select 0, %s10, %s8
  $region1: #{tpu_custom_call.1} parent=0
    #allocation4 [shape = 'u8[16384]{0}', space=vmem, size = 0x4000, scoped, tag = 'input window, operand 0']
    #allocation5 [shape = 's32[2]{0}', space=sflag, size = 0x8, scoped, tag = 'scoped memory for tpu_custom_call.1']
    #allocation6 [shape = 's32[2]{0}', space=sflag, size = 0x8, scoped, tag = 'scoped memory for tpu_custom_call.1']
    #allocation7 [shape = 'u8[131072]{0}', space=vmem, size = 0x20000, scoped, tag = 'input window, operand 3, single buffered']
    #allocation8 [shape = 's32[1]{0}', space=sflag, size = 0x4, scoped, tag = 'scoped memory for tpu_custom_call.1']
    #allocation9 [shape = 'u8[131072]{0}', space=vmem, size = 0x20000, scoped, tag = 'input window, operand 5, single buffered']
    #allocation10 [shape = 'u8[16384]{0}', space=vmem, size = 0x4000, scoped, tag = 'output window, operand 0']
    %12 = vsyncpa [#allocation5], 0
    %s13 = scalar_lea.sflag [#allocation5], 1
    %14 = vsyncpa %s13, 0
    %15 = vsyncpa [#allocation8], 0
    %16 = vsyncpa [#allocation6], 0
    %s17 = scalar_lea.sflag [#allocation6], 1
    %18 = vsyncpa %s17, 0
    loop: start=0, step=1, limit=4
    $region2: #{tpu_custom_call.1} parent=1 // loop_pre_header
      _
    $region3: #{tpu_custom_call.1} parent=1 // loop_header
      %s20 = sphi 0, %s24
      %p21 = scmp.ge.s32.totalorder %s20, 4
      %s27 = sphi 0, %s39
      %s28 = sphi 0, %s35
      %s29 = sphi 0, %s27
      %s30 = sphi 0, %s28
      %s31 = sphi 0, %s29
      %s32 = sphi 0, %s30
      %s42 = sphi 0, %s44
      %s45 = sphi 0, %s42
      %s46 = sphi 0, %s45
      %s62 = sphi 0, %s46
      %s66 = sphi 0, %s66
      %s68 = sphi 0, %s66
      %s69 = sphi 0, %s68
      %s83 = sphi 0, %s69
      %s87 = sphi 0, %s87
      %s89 = sphi 0, %s87
      %s90 = sphi 0, %s89
      %s104 = sphi 0, %s90
      %s110 = sphi 0, %s112
      %s113 = sphi 0, %s110
      %s114 = sphi 0, %s113
      %s130 = sphi 0, %s114
      %s136 = sphi 0, %s138
      %s139 = sphi 0, %s136
      %s140 = sphi 0, %s139
      %s156 = sphi 0, %s140
      %s162 = sphi 0, %s164
      %s165 = sphi 0, %s162
      %s166 = sphi 0, %s165
      %s182 = sphi 0, %s166
      %s186 = sphi 0, %s186
      %s188 = sphi 0, %s186
      %s189 = sphi 0, %s188
      %s203 = sphi 0, %s189
      %s209 = sphi 0, %s211
      %s212 = sphi 0, %s209
      %s213 = sphi 0, %s212
      %s229 = sphi 0, %s213
    $region4: #{tpu_custom_call.1} parent=1 // loop_header_branch
      %23 = sbr.rel (%p21) target = $region8
    $region5: #{tpu_custom_call.1} parent=1 // loop_body
      %s25 = ssub.s32 %s20, 1
      %s26 = ssub.s32 %s20, 2
      %s33 = sadd.s32 1, %s28
      %p34 = scmp.ge.s32.totalorder %s33, 1
      %s35 = scalar_select %p34, 0, %s33
      %s36 = sadd.s32 1, %s27
      %s37 = scalar_select %p34, %s36, %s27
      %p38 = scmp.ge.s32.totalorder %s37, 2
      %s39 = scalar_select %p38, 0, %s37
      %s40 = ssub.s32 %s27, %s39
      %p41 = scmp.eq.s32.totalorder %s40, 0
      %s43 = sadd.s32 %s42, 1
      %s44 = scalar_select %p41, %s42, %s43
      %p47 = pneg %p41
      %p48 = scmp.eq.s32.totalorder %s20, 1
      %p49 = por %p47, %p48
      %p50 = scmp.ne.s32.totalorder %s42, %s45
      %p51 = scmp.eq.s32.totalorder %s20, 0
      %p52 = por %p50, %p51
      %p53 = scmp.ne.s32.totalorder %s42, %s45
      %p54 = scmp.eq.s32.totalorder %s25, 1
      %p55 = por %p53, %p54
      %p56 = scmp.ne.s32.totalorder %s45, %s46
      %p57 = scmp.eq.s32.totalorder %s25, 0
      %p58 = por %p56, %p57
      %p59 = scmp.ne.s32.totalorder %s45, %s46
      %p60 = scmp.eq.s32.totalorder %s26, 1
      %p61 = por %p59, %p60
      %p63 = scmp.ne.s32.totalorder %s46, %s62
      %p64 = scmp.eq.s32.totalorder %s26, 0
      %p65 = por %p63, %p64
      %s67 = sadd.s32 %s66, 1
      %p70 = scmp.eq.s32.totalorder %s20, 1
      %p71 = scmp.ne.s32.totalorder %s66, %s68
      %p72 = scmp.eq.s32.totalorder %s20, 0
      %p73 = por %p71, %p72
      %p74 = scmp.ne.s32.totalorder %s66, %s68
      %p75 = scmp.eq.s32.totalorder %s25, 1
      %p76 = por %p74, %p75
      %p77 = scmp.ne.s32.totalorder %s68, %s69
      %p78 = scmp.eq.s32.totalorder %s25, 0
      %p79 = por %p77, %p78
      %p80 = scmp.ne.s32.totalorder %s68, %s69
      %p81 = scmp.eq.s32.totalorder %s26, 1
      %p82 = por %p80, %p81
      %p84 = scmp.ne.s32.totalorder %s69, %s83
      %p85 = scmp.eq.s32.totalorder %s26, 0
      %p86 = por %p84, %p85
      %s88 = sadd.s32 %s87, 1
      %p91 = scmp.eq.s32.totalorder %s20, 1
      %p92 = scmp.ne.s32.totalorder %s87, %s89
      %p93 = scmp.eq.s32.totalorder %s20, 0
      %p94 = por %p92, %p93
      %p95 = scmp.ne.s32.totalorder %s87, %s89
      %p96 = scmp.eq.s32.totalorder %s25, 1
      %p97 = por %p95, %p96
      %p98 = scmp.ne.s32.totalorder %s89, %s90
      %p99 = scmp.eq.s32.totalorder %s25, 0
      %p100 = por %p98, %p99
      %p101 = scmp.ne.s32.totalorder %s89, %s90
      %p102 = scmp.eq.s32.totalorder %s26, 1
      %p103 = por %p101, %p102
      %p105 = scmp.ne.s32.totalorder %s90, %s104
      %p106 = scmp.eq.s32.totalorder %s26, 0
      %p107 = por %p105, %p106
      %s108 = ssub.s32 %s28, %s35
      %p109 = scmp.eq.s32.totalorder %s108, 0
      %s111 = sadd.s32 %s110, 1
      %s112 = scalar_select %p109, %s110, %s111
      %p115 = pneg %p109
      %p116 = scmp.eq.s32.totalorder %s20, 1
      %p117 = por %p115, %p116
      %p118 = scmp.ne.s32.totalorder %s110, %s113
      %p119 = scmp.eq.s32.totalorder %s20, 0
      %p120 = por %p118, %p119
      %p121 = scmp.ne.s32.totalorder %s110, %s113
      %p122 = scmp.eq.s32.totalorder %s25, 1
      %p123 = por %p121, %p122
      %p124 = scmp.ne.s32.totalorder %s113, %s114
      %p125 = scmp.eq.s32.totalorder %s25, 0
      %p126 = por %p124, %p125
      %p127 = scmp.ne.s32.totalorder %s113, %s114
      %p128 = scmp.eq.s32.totalorder %s26, 1
      %p129 = por %p127, %p128
      %p131 = scmp.ne.s32.totalorder %s114, %s130
      %p132 = scmp.eq.s32.totalorder %s26, 0
      %p133 = por %p131, %p132
      %s134 = ssub.s32 %s28, %s35
      %p135 = scmp.eq.s32.totalorder %s134, 0
      %s137 = sadd.s32 %s136, 1
      %s138 = scalar_select %p135, %s136, %s137
      %p141 = pneg %p135
      %p142 = scmp.eq.s32.totalorder %s20, 1
      %p143 = por %p141, %p142
      %p144 = scmp.ne.s32.totalorder %s136, %s139
      %p145 = scmp.eq.s32.totalorder %s20, 0
      %p146 = por %p144, %p145
      %p147 = scmp.ne.s32.totalorder %s136, %s139
      %p148 = scmp.eq.s32.totalorder %s25, 1
      %p149 = por %p147, %p148
      %p150 = scmp.ne.s32.totalorder %s139, %s140
      %p151 = scmp.eq.s32.totalorder %s25, 0
      %p152 = por %p150, %p151
      %p153 = scmp.ne.s32.totalorder %s139, %s140
      %p154 = scmp.eq.s32.totalorder %s26, 1
      %p155 = por %p153, %p154
      %p157 = scmp.ne.s32.totalorder %s140, %s156
      %p158 = scmp.eq.s32.totalorder %s26, 0
      %p159 = por %p157, %p158
      %s160 = ssub.s32 %s28, %s35
      %p161 = scmp.eq.s32.totalorder %s160, 0
      %s163 = sadd.s32 %s162, 1
      %s164 = scalar_select %p161, %s162, %s163
      %p167 = pneg %p161
      %p168 = scmp.eq.s32.totalorder %s20, 1
      %p169 = por %p167, %p168
      %p170 = scmp.ne.s32.totalorder %s162, %s165
      %p171 = scmp.eq.s32.totalorder %s20, 0
      %p172 = por %p170, %p171
      %p173 = scmp.ne.s32.totalorder %s162, %s165
      %p174 = scmp.eq.s32.totalorder %s25, 1
      %p175 = por %p173, %p174
      %p176 = scmp.ne.s32.totalorder %s165, %s166
      %p177 = scmp.eq.s32.totalorder %s25, 0
      %p178 = por %p176, %p177
      %p179 = scmp.ne.s32.totalorder %s165, %s166
      %p180 = scmp.eq.s32.totalorder %s26, 1
      %p181 = por %p179, %p180
      %p183 = scmp.ne.s32.totalorder %s166, %s182
      %p184 = scmp.eq.s32.totalorder %s26, 0
      %p185 = por %p183, %p184
      %s187 = sadd.s32 %s186, 1
      %p190 = scmp.eq.s32.totalorder %s20, 1
      %p191 = scmp.ne.s32.totalorder %s186, %s188
      %p192 = scmp.eq.s32.totalorder %s20, 0
      %p193 = por %p191, %p192
      %p194 = scmp.ne.s32.totalorder %s186, %s188
      %p195 = scmp.eq.s32.totalorder %s25, 1
      %p196 = por %p194, %p195
      %p197 = scmp.ne.s32.totalorder %s188, %s189
      %p198 = scmp.eq.s32.totalorder %s25, 0
      %p199 = por %p197, %p198
      %p200 = scmp.ne.s32.totalorder %s188, %s189
      %p201 = scmp.eq.s32.totalorder %s26, 1
      %p202 = por %p200, %p201
      %p204 = scmp.ne.s32.totalorder %s189, %s203
      %p205 = scmp.eq.s32.totalorder %s26, 0
      %p206 = por %p204, %p205
      %s207 = ssub.s32 %s27, %s39
      %p208 = scmp.eq.s32.totalorder %s207, 0
      %s210 = sadd.s32 %s209, 1
      %s211 = scalar_select %p208, %s209, %s210
      %p214 = pneg %p208
      %p215 = scmp.eq.s32.totalorder %s20, 1
      %p216 = por %p214, %p215
      %p217 = scmp.ne.s32.totalorder %s209, %s212
      %p218 = scmp.eq.s32.totalorder %s20, 0
      %p219 = por %p217, %p218
      %p220 = scmp.ne.s32.totalorder %s209, %s212
      %p221 = scmp.eq.s32.totalorder %s25, 1
      %p222 = por %p220, %p221
      %p223 = scmp.ne.s32.totalorder %s212, %s213
      %p224 = scmp.eq.s32.totalorder %s25, 0
      %p225 = por %p223, %p224
      %p226 = scmp.ne.s32.totalorder %s212, %s213
      %p227 = scmp.eq.s32.totalorder %s26, 1
      %p228 = por %p226, %p227
      %p230 = scmp.ne.s32.totalorder %s213, %s229
      %p231 = scmp.eq.s32.totalorder %s26, 0
      %p232 = por %p230, %p231
      %p233 = scmp.le.s32.totalorder 1, %s20
      %p234 = scmp.lt.s32.totalorder %s20, 3
      %p235 = pnand %p233, %p234
      %p236 = pneg %p235
      // Predicated region
      $region9: #{tpu_custom_call.1} parent=5 // pred_check
        _
      $region10: #{tpu_custom_call.1} parent=5 // pred_check_branch
        %238 = sbr.rel (%p235) target = $region12
      $region11: #{tpu_custom_call.1} parent=5 // pred_region
        %s239 = ssub.s32 %s20, 1
        // Predicated region
        $region13: #{tpu_custom_call.1} parent=11 // pred_check
          %p240 = pneg %p79
        $region14: #{tpu_custom_call.1} parent=11 // pred_check_branch
          %242 = sbr.rel (%p240) target = $region16
        $region15: #{tpu_custom_call.1} parent=11 // pred_region
          _
        $region16: #{tpu_custom_call.1} parent=11 // pred_fallthru
          _
        // Predicated region
        $region17: #{tpu_custom_call.1} parent=11 // pred_check
          %p243 = pneg %p100
        $region18: #{tpu_custom_call.1} parent=11 // pred_check_branch
          %245 = sbr.rel (%p243) target = $region20
        $region19: #{tpu_custom_call.1} parent=11 // pred_region
          _
        $region20: #{tpu_custom_call.1} parent=11 // pred_fallthru
          _
        // Predicated region
        $region21: #{tpu_custom_call.1} parent=11 // pred_check
          %p246 = pneg %p126
        $region22: #{tpu_custom_call.1} parent=11 // pred_check_branch
          %248 = sbr.rel (%p246) target = $region24
        $region23: #{tpu_custom_call.1} parent=11 // pred_region
          %s249 = smul.u32 4, %s30
          %s251 = ssub.s32 4096, 4096
          %252 = vsyncadd [#allocation8], %s251
          %s253 = smul.addr %s249, 64
          %s254 = scalar_lea.hbm %s3, %s253
          %s255 = sshll.u32 [#allocation7], 4
          %s256 = int_to_ptr.vmem [resolvable:$true] %s255
          %261 = dma.hbm_to_vmem [thread:$0]  %s254, 4096, %s256, [#allocation8], 256, 256, 16
        $region24: #{tpu_custom_call.1} parent=11 // pred_fallthru
          _
        // Predicated region
        $region25: #{tpu_custom_call.1} parent=11 // pred_check
          %p262 = pneg %p152
        $region26: #{tpu_custom_call.1} parent=11 // pred_check_branch
          %264 = sbr.rel (%p262) target = $region28
        $region27: #{tpu_custom_call.1} parent=11 // pred_region
          %s265 = smul.u32 4, %s30
          %p266 = scmp.lt.s32.totalorder %s265, 3
          %s267 = scalar_select %p266, %s265, 3
          %s268 = scalar_lea.vmem %s4, %s267
          %s269 = smul.u32 4, %s30
        $region28: #{tpu_custom_call.1} parent=11 // pred_fallthru
          _
        // Predicated region
        $region29: #{tpu_custom_call.1} parent=11 // pred_check
          %p270 = pneg %p178
        $region30: #{tpu_custom_call.1} parent=11 // pred_check_branch
          %272 = sbr.rel (%p270) target = $region32
        $region31: #{tpu_custom_call.1} parent=11 // pred_region
          %s273 = smul.u32 64, %s30
          %s275 = ssub.s32 4096, 4096
          %276 = vsyncadd [#allocation8], %s275
          %s277 = smul.addr %s273, 64
          %s278 = scalar_lea.hbm %s5, %s277
          %s279 = sshll.u32 [#allocation9], 4
          %s280 = int_to_ptr.vmem [resolvable:$true] %s279
          %285 = dma.hbm_to_vmem [thread:$0]  %s278, 4096, %s280, [#allocation8], 64, 64, 4
        $region32: #{tpu_custom_call.1} parent=11 // pred_fallthru
          _
        // Predicated region
        $region33: #{tpu_custom_call.1} parent=11 // pred_check
          %p286 = pneg %p199
        $region34: #{tpu_custom_call.1} parent=11 // pred_check_branch
          %288 = sbr.rel (%p286) target = $region36
        $region35: #{tpu_custom_call.1} parent=11 // pred_region
          _
        $region36: #{tpu_custom_call.1} parent=11 // pred_fallthru
          _
      $region12: #{tpu_custom_call.1} parent=5 // pred_fallthru
        _
      %p289 = scmp.lt.s32.totalorder %s20, 2
      // Predicated region
      $region37: #{tpu_custom_call.1} parent=5 // pred_check
        %p290 = pneg %p289
      $region38: #{tpu_custom_call.1} parent=5 // pred_check_branch
        %292 = sbr.rel (%p290) target = $region40
      $region39: #{tpu_custom_call.1} parent=5 // pred_region
        // Predicated region
        $region41: #{tpu_custom_call.1} parent=39 // pred_check
          %p293 = pneg %p52
        $region42: #{tpu_custom_call.1} parent=39 // pred_check_branch
          %295 = sbr.rel (%p293) target = $region44
        $region43: #{tpu_custom_call.1} parent=39 // pred_region
          %s296 = sand.u32 %s42, 1
          %s297 = scalar_lea.sflag [#allocation5], %s296
          %s298 = sand.u32 %s42, 1
          %s299 = smul.addr %s298, 16
          %s300 = scalar_lea.vmem [#allocation4], %s299
          %s301 = smul.u32 2, %s27
          %s303 = ssub.s32 256, 256
          %304 = vsyncadd %s297, %s303
          %s305 = smul.addr %s301, 128
          %s306 = scalar_lea.hbm %s0, %s305
          %s307 = sshll.u32 %s300, 4
          %s308 = int_to_ptr.vmem [resolvable:$true] %s307
          %313 = dma.hbm_to_vmem [thread:$0]  %s306, 256, %s308, %s297, 128, 128, 8
        $region44: #{tpu_custom_call.1} parent=39 // pred_fallthru
          _
      $region40: #{tpu_custom_call.1} parent=5 // pred_fallthru
        _
      %p314 = scmp.le.s32.totalorder 1, %s20
      %p315 = scmp.lt.s32.totalorder %s20, 3
      %p316 = pnand %p314, %p315
      %p317 = pneg %p316
      // Predicated region
      $region45: #{tpu_custom_call.1} parent=5 // pred_check
        _
      $region46: #{tpu_custom_call.1} parent=5 // pred_check_branch
        %319 = sbr.rel (%p316) target = $region48
      $region47: #{tpu_custom_call.1} parent=5 // pred_region
        %s320 = ssub.s32 %s20, 1
        %s321 = sand.u32 %s45, 1
        %s322 = scalar_lea.sflag [#allocation5], %s321
        %s323 = sand.u32 %s45, 1
        %s324 = smul.addr %s323, 16
        %s325 = scalar_lea.vmem [#allocation4], %s324
        // Predicated region
        $region49: #{tpu_custom_call.1} parent=47 // pred_check
          %p326 = pneg %p58
        $region50: #{tpu_custom_call.1} parent=47 // pred_check_branch
          %328 = sbr.rel (%p326) target = $region52
        $region51: #{tpu_custom_call.1} parent=47 // pred_region
          %329 = dma.done %s322, 256
        $region52: #{tpu_custom_call.1} parent=47 // pred_fallthru
          _
        // Predicated region
        $region53: #{tpu_custom_call.1} parent=47 // pred_check
          %p330 = pneg %p126
        $region54: #{tpu_custom_call.1} parent=47 // pred_check_branch
          %332 = sbr.rel (%p330) target = $region56
        $region55: #{tpu_custom_call.1} parent=47 // pred_region
          %333 = dma.done [#allocation8], 4096
        $region56: #{tpu_custom_call.1} parent=47 // pred_fallthru
          _
        // Predicated region
        $region57: #{tpu_custom_call.1} parent=47 // pred_check
          %p334 = pneg %p178
        $region58: #{tpu_custom_call.1} parent=47 // pred_check_branch
          %336 = sbr.rel (%p334) target = $region60
        $region59: #{tpu_custom_call.1} parent=47 // pred_region
          %337 = dma.done [#allocation8], 4096
        $region60: #{tpu_custom_call.1} parent=47 // pred_fallthru
          _
        %s338 = sand.u32 %s45, 1
        %s339 = scalar_lea.sflag [#allocation5], %s338
        %s340 = sand.u32 %s45, 1
        %s341 = smul.addr %s340, 16
        %s342 = scalar_lea.vmem [#allocation4], %s341
        %p343 = pneg %p58
        %p344 = pneg %p55
        %p345 = pneg %p79
        %p346 = pneg %p76
        %p347 = pneg %p100
        %p348 = pneg %p97
        %p349 = pneg %p126
        %p350 = pneg %p123
        %s351 = smul.u32 4, %s30
        %p352 = scmp.lt.s32.totalorder %s351, 3
        %s353 = scalar_select %p352, %s351, 3
        %s354 = scalar_lea.vmem %s4, %s353
        %p355 = pneg %p152
        %p356 = pneg %p149
        %p357 = pneg %p178
        %p358 = pneg %p175
        %p359 = pneg %p199
        %p360 = pneg %p196
        %p361 = pneg %p225
        %p362 = pneg %p222
        %s363 = sand.u32 %s212, 1
        %s364 = scalar_lea.sflag [#allocation6], %s363
        %s365 = sand.u32 %s212, 1
        %s366 = smul.addr %s365, 16
        %s367 = scalar_lea.vmem [#allocation10], %s366
        %s368 = smul.u32 2, %s29
        %s369 = smul.u32 4, %s30
        %s370 = smul.u32 4, %s30
        %p371 = scmp.lt.s32.totalorder %s370, 3
        %s372 = scalar_select %p371, %s370, 3
        %s373 = scalar_lea.vmem %s4, %s372
        %s374 = smul.u32 4, %s30
        %s375 = smul.u32 64, %s30
        %s376 = smul.u32 2, %s29
        %p378 = scmp.eq.s32.totalorder %s30, 0
        // Predicated region
        $region61: #{tpu_custom_call.1} parent=47 // pred_check
          %p379 = pneg %p378
        $region62: #{tpu_custom_call.1} parent=47 // pred_check_branch
          %381 = sbr.rel (%p379) target = $region64
        $region63: #{tpu_custom_call.1} parent=47 // pred_region
          %v382 = vld [vmem:[%s325] sm:$0xff]
          %v383 = vld [vmem:[%s325 + $0x8] sm:$0xff]
          %384 = vadd.xlane.f32.xlu0 %v382
          %v385 = vpop.xlane.xlu0 %384
          %386 = vadd.xlane.f32.xlu0 %v383
          %v387 = vpop.xlane.xlu0 %386
          %v388 = vrcp.pop 128.0
          %v389 = vmul.f32 %v385, %v388
          %v390 = vmul.f32 %v387, %v388
          %v391 = vsub.f32 %v382, %v389
          %v392 = vsub.f32 %v383, %v390
          %v393 = vmul.f32 %v391, %v391
          %v394 = vmul.f32 %v392, %v392
          %395 = vadd.xlane.f32.xlu0 %v393
          %v396 = vpop.xlane.xlu0 %395
          %397 = vadd.xlane.f32.xlu0 %v394
          %v398 = vpop.xlane.xlu0 %397
          %v399 = vmul.f32 %v396, %v388
          %v400 = vmul.f32 %v398, %v388
          %v401 = vadd.f32 %v399, 1e-05
          %v402 = vadd.f32 %v400, 1e-05
          %v403 = vrsqrt.pop %v401
          %v404 = vrsqrt.pop %v402
          %v405 = vmul.f32 %v391, %v403
          %v406 = vmul.f32 %v392, %v404
          %v407 = vld [vmem:[%s1] sm:$0x1]
          %v409 = vlaneseq
          %v410 = vshrl.u32 %v409, 7
          %v411 = vsub.s32 0, %v410
          %v412 = vrot.slane %v407, %v411
          %v414 = vmul.f32 %v405, %v412
          %v415 = vmul.f32 %v406, %v412
          %v416 = vld [vmem:[%s2] sm:$0x1]
          %v418 = vlaneseq
          %v419 = vshrl.u32 %v418, 7
          %v420 = vsub.s32 0, %v419
          %v421 = vrot.slane %v416, %v420
          %v423 = vadd.f32 %v414, %v421
          %v424 = vadd.f32 %v415, %v421
          %v425 = vpack.c.bf16 %v424, %v423
          %426 = vst [vmem:[#allocation2] sm:$0xff] %v425
          %427 = vst [vmem:[#allocation3] sm:$0xff] 0.0
          %428 = vst [vmem:[#allocation3 + $0x8] sm:$0xff] 0.0
        $region64: #{tpu_custom_call.1} parent=47 // pred_fallthru
          _
        %v429 = vld [vmem:[#allocation2] sm:$0xff]
        %v430 = vld [vmem:[#allocation7] sm:$0xff]
        %v431 = vld [vmem:[#allocation7 + $0x8] sm:$0xff]
        %v432 = vld [vmem:[#allocation7 + $0x10] sm:$0xff]
        %v433 = vld [vmem:[#allocation7 + $0x18] sm:$0xff]
        %v434 = vld [vmem:[#allocation7 + $0x20] sm:$0xff]
        %v435 = vld [vmem:[#allocation7 + $0x28] sm:$0xff]
        %v436 = vld [vmem:[#allocation7 + $0x30] sm:$0xff]
        %v437 = vld [vmem:[#allocation7 + $0x38] sm:$0xff]
        %v438 = vld [vmem:[#allocation7 + $0x40] sm:$0xff]
        %v439 = vld [vmem:[#allocation7 + $0x48] sm:$0xff]
        %v440 = vld [vmem:[#allocation7 + $0x50] sm:$0xff]
        %v441 = vld [vmem:[#allocation7 + $0x58] sm:$0xff]
        %v442 = vld [vmem:[#allocation7 + $0x60] sm:$0xff]
        %v443 = vld [vmem:[#allocation7 + $0x68] sm:$0xff]
        %v444 = vld [vmem:[#allocation7 + $0x70] sm:$0xff]
        %v445 = vld [vmem:[#allocation7 + $0x78] sm:$0xff]
        %v446 = vld [vmem:[#allocation7 + $0x80] sm:$0xff]
        %v447 = vld [vmem:[#allocation7 + $0x88] sm:$0xff]
        %v448 = vld [vmem:[#allocation7 + $0x90] sm:$0xff]
        %v449 = vld [vmem:[#allocation7 + $0x98] sm:$0xff]
        %v450 = vld [vmem:[#allocation7 + $0xa0] sm:$0xff]
        %v451 = vld [vmem:[#allocation7 + $0xa8] sm:$0xff]
        %v452 = vld [vmem:[#allocation7 + $0xb0] sm:$0xff]
        %v453 = vld [vmem:[#allocation7 + $0xb8] sm:$0xff]
        %v454 = vld [vmem:[#allocation7 + $0xc0] sm:$0xff]
        %v455 = vld [vmem:[#allocation7 + $0xc8] sm:$0xff]
        %v456 = vld [vmem:[#allocation7 + $0xd0] sm:$0xff]
        %v457 = vld [vmem:[#allocation7 + $0xd8] sm:$0xff]
        %v458 = vld [vmem:[#allocation7 + $0xe0] sm:$0xff]
        %v459 = vld [vmem:[#allocation7 + $0xe8] sm:$0xff]
        %v460 = vld [vmem:[#allocation7 + $0xf0] sm:$0xff]
        %v461 = vld [vmem:[#allocation7 + $0xf8] sm:$0xff]
        %v462 = vld [vmem:[%s373] sm:$0xf]
        %v464 = vlaneseq
        %v465 = vshrl.u32 %v464, 7
        %v466 = vsub.s32 0, %v465
        %v467 = vrot.slane %v462, %v466
        %v468 = vlaneseq
        %v469 = vshrl.u32 %v468, 7
        %v470 = vsub.s32 1, %v469
        %v471 = vrot.slane %v462, %v470
        %v472 = vlaneseq
        %v473 = vshrl.u32 %v472, 7
        %v474 = vsub.s32 2, %v473
        %v475 = vrot.slane %v462, %v474
        %v476 = vlaneseq
        %v477 = vshrl.u32 %v476, 7
        %v478 = vsub.s32 3, %v477
        %v479 = vrot.slane %v462, %v478
        %v516 = vunpack.c.l.b16 %v430
        %v517 = vunpack.c.h.b16 %v430
        %v518 = vunpack.c.l.b16 %v431
        %v519 = vunpack.c.h.b16 %v431
        %v520 = vunpack.c.l.b16 %v432
        %v521 = vunpack.c.h.b16 %v432
        %v522 = vunpack.c.l.b16 %v433
        %v523 = vunpack.c.h.b16 %v433
        %v524 = vunpack.c.l.b16 %v434
        %v525 = vunpack.c.h.b16 %v434
        %v526 = vunpack.c.l.b16 %v435
        %v527 = vunpack.c.h.b16 %v435
        %v528 = vunpack.c.l.b16 %v436
        %v529 = vunpack.c.h.b16 %v436
        %v530 = vunpack.c.l.b16 %v437
        %v531 = vunpack.c.h.b16 %v437
        %v532 = vunpack.c.l.b16 %v438
        %v533 = vunpack.c.h.b16 %v438
        %v534 = vunpack.c.l.b16 %v439
        %v535 = vunpack.c.h.b16 %v439
        %v536 = vunpack.c.l.b16 %v440
        %v537 = vunpack.c.h.b16 %v440
        %v538 = vunpack.c.l.b16 %v441
        %v539 = vunpack.c.h.b16 %v441
        %v540 = vunpack.c.l.b16 %v442
        %v541 = vunpack.c.h.b16 %v442
        %v542 = vunpack.c.l.b16 %v443
        %v543 = vunpack.c.h.b16 %v443
        %v544 = vunpack.c.l.b16 %v444
        %v545 = vunpack.c.h.b16 %v444
        %v546 = vunpack.c.l.b16 %v445
        %v547 = vunpack.c.h.b16 %v445
        %v548 = vunpack.c.l.b16 %v446
        %v549 = vunpack.c.h.b16 %v446
        %v550 = vunpack.c.l.b16 %v447
        %v551 = vunpack.c.h.b16 %v447
        %v552 = vunpack.c.l.b16 %v448
        %v553 = vunpack.c.h.b16 %v448
        %v554 = vunpack.c.l.b16 %v449
        %v555 = vunpack.c.h.b16 %v449
        %v556 = vunpack.c.l.b16 %v450
        %v557 = vunpack.c.h.b16 %v450
        %v558 = vunpack.c.l.b16 %v451
        %v559 = vunpack.c.h.b16 %v451
        %v560 = vunpack.c.l.b16 %v452
        %v561 = vunpack.c.h.b16 %v452
        %v562 = vunpack.c.l.b16 %v453
        %v563 = vunpack.c.h.b16 %v453
        %v564 = vunpack.c.l.b16 %v454
        %v565 = vunpack.c.h.b16 %v454
        %v566 = vunpack.c.l.b16 %v455
        %v567 = vunpack.c.h.b16 %v455
        %v568 = vunpack.c.l.b16 %v456
        %v569 = vunpack.c.h.b16 %v456
        %v570 = vunpack.c.l.b16 %v457
        %v571 = vunpack.c.h.b16 %v457
        %v572 = vunpack.c.l.b16 %v458
        %v573 = vunpack.c.h.b16 %v458
        %v574 = vunpack.c.l.b16 %v459
        %v575 = vunpack.c.h.b16 %v459
        %v576 = vunpack.c.l.b16 %v460
        %v577 = vunpack.c.h.b16 %v460
        %v578 = vunpack.c.l.b16 %v461
        %v579 = vunpack.c.h.b16 %v461
        %v580 = vpack.c.b16 %v520, %v516
        %v581 = vpack.c.b16 %v521, %v517
        %v582 = vpack.c.b16 %v522, %v518
        %v583 = vpack.c.b16 %v523, %v519
        %v584 = vpack.c.b16 %v528, %v524
        %v585 = vpack.c.b16 %v529, %v525
        %v586 = vpack.c.b16 %v530, %v526
        %v587 = vpack.c.b16 %v531, %v527
        %v588 = vpack.c.b16 %v536, %v532
        %v589 = vpack.c.b16 %v537, %v533
        %v590 = vpack.c.b16 %v538, %v534
        %v591 = vpack.c.b16 %v539, %v535
        %v592 = vpack.c.b16 %v544, %v540
        %v593 = vpack.c.b16 %v545, %v541
        %v594 = vpack.c.b16 %v546, %v542
        %v595 = vpack.c.b16 %v547, %v543
        %v596 = vpack.c.b16 %v552, %v548
        %v597 = vpack.c.b16 %v553, %v549
        %v598 = vpack.c.b16 %v554, %v550
        %v599 = vpack.c.b16 %v555, %v551
        %v600 = vpack.c.b16 %v560, %v556
        %v601 = vpack.c.b16 %v561, %v557
        %v602 = vpack.c.b16 %v562, %v558
        %v603 = vpack.c.b16 %v563, %v559
        %v604 = vpack.c.b16 %v568, %v564
        %v605 = vpack.c.b16 %v569, %v565
        %v606 = vpack.c.b16 %v570, %v566
        %v607 = vpack.c.b16 %v571, %v567
        %v608 = vpack.c.b16 %v576, %v572
        %v609 = vpack.c.b16 %v577, %v573
        %v610 = vpack.c.b16 %v578, %v574
        %v611 = vpack.c.b16 %v579, %v575
        %644 = vmatprep.subr.bf16.mxu0 %v581
        %645 = vmatpush1.bf16.msra.mxu0 %v580
        %646 = vmatprep.subr.bf16.mxu0 %v585
        %647 = vmatpush1.bf16.msra.mxu0 %v584
        %648 = vmatprep.subr.bf16.mxu0 %v589
        %649 = vmatpush1.bf16.msra.mxu0 %v588
        %650 = vmatprep.subr.bf16.mxu0 %v593
        %651 = vmatpush1.bf16.msra.mxu0 %v592
        %652 = vmatprep.subr.bf16.mxu0 %v597
        %653 = vmatpush1.bf16.msra.mxu0 %v596
        %654 = vmatprep.subr.bf16.mxu0 %v601
        %655 = vmatpush1.bf16.msra.mxu0 %v600
        %656 = vmatprep.subr.bf16.mxu0 %v605
        %657 = vmatpush1.bf16.msra.mxu0 %v604
        %658 = vmatprep.subr.bf16.mxu0 %v609
        %659 = vmatpush1.bf16.msra.mxu0 %v608
        %660 = vmatprep.subr.bf16.mxu0 0
        %661 = vmatpush1.bf16.msra.mxu0 0
        %662 = vmatprep.subr.bf16.mxu0 0
        %663 = vmatpush1.bf16.msra.mxu0 0
        %664 = vmatprep.subr.bf16.mxu0 0
        %665 = vmatpush1.bf16.msra.mxu0 0
        %666 = vmatprep.subr.bf16.mxu0 0
        %667 = vmatpush1.bf16.msra.mxu0 0
        %668 = vmatprep.subr.bf16.mxu0 0
        %669 = vmatpush1.bf16.msra.mxu0 0
        %670 = vmatprep.subr.bf16.mxu0 0
        %671 = vmatpush1.bf16.msra.mxu0 0
        %672 = vmatprep.subr.bf16.mxu0 0
        %673 = vmatpush1.bf16.msra.mxu0 0
        %674 = vmatprep.subr.bf16.mxu0 0
        %675 = vmatpush1.bf16.msra.mxu0 0
        %676 = vmatprep.mubr.bf16.mxu0 0
        %677 = vmatmul.mubr.bf16.gmra.mrb[0].mxu0 %v429
        %v678 = vpop.f32.mrb[0].mxu0
        %v679 = vadd.f32 %v467, %v678
        %v680 = vpop.f32.mrb[0].mxu0
        %v681 = vadd.f32 %v471, %v680
        %v682 = vpop.f32.mrb[0].mxu0
        %v683 = vadd.f32 %v467, %v682
        %v684 = vpop.f32.mrb[0].mxu0
        %v685 = vadd.f32 %v471, %v684
        %686 = vdwg.mxu0
        %687 = vmatprep.subr.bf16.mxu0 %v583
        %688 = vmatpush1.bf16.msra.mxu0 %v582
        %689 = vmatprep.subr.bf16.mxu0 %v587
        %690 = vmatpush1.bf16.msra.mxu0 %v586
        %691 = vmatprep.subr.bf16.mxu0 %v591
        %692 = vmatpush1.bf16.msra.mxu0 %v590
        %693 = vmatprep.subr.bf16.mxu0 %v595
        %694 = vmatpush1.bf16.msra.mxu0 %v594
        %695 = vmatprep.subr.bf16.mxu0 %v599
        %696 = vmatpush1.bf16.msra.mxu0 %v598
        %697 = vmatprep.subr.bf16.mxu0 %v603
        %698 = vmatpush1.bf16.msra.mxu0 %v602
        %699 = vmatprep.subr.bf16.mxu0 %v607
        %700 = vmatpush1.bf16.msra.mxu0 %v606
        %701 = vmatprep.subr.bf16.mxu0 %v611
        %702 = vmatpush1.bf16.msra.mxu0 %v610
        %703 = vmatprep.subr.bf16.mxu0 0
        %704 = vmatpush1.bf16.msra.mxu0 0
        %705 = vmatprep.subr.bf16.mxu0 0
        %706 = vmatpush1.bf16.msra.mxu0 0
        %707 = vmatprep.subr.bf16.mxu0 0
        %708 = vmatpush1.bf16.msra.mxu0 0
        %709 = vmatprep.subr.bf16.mxu0 0
        %710 = vmatpush1.bf16.msra.mxu0 0
        %711 = vmatprep.subr.bf16.mxu0 0
        %712 = vmatpush1.bf16.msra.mxu0 0
        %713 = vmatprep.subr.bf16.mxu0 0
        %714 = vmatpush1.bf16.msra.mxu0 0
        %715 = vmatprep.subr.bf16.mxu0 0
        %716 = vmatpush1.bf16.msra.mxu0 0
        %717 = vmatprep.subr.bf16.mxu0 0
        %718 = vmatpush1.bf16.msra.mxu0 0
        %719 = vmatprep.mubr.bf16.mxu0 0
        %720 = vmatmul.mubr.bf16.gmra.mrb[0].mxu0 %v429
        %v721 = vpop.f32.mrb[0].mxu0
        %v722 = vadd.f32 %v475, %v721
        %v723 = vpop.f32.mrb[0].mxu0
        %v724 = vadd.f32 %v479, %v723
        %v725 = vpop.f32.mrb[0].mxu0
        %v726 = vadd.f32 %v475, %v725
        %v727 = vpop.f32.mrb[0].mxu0
        %v728 = vadd.f32 %v479, %v727
        %729 = vdwg.mxu0
        %v730 = vxor.u32 %v679, 2147483648
        %v731 = vxor.u32 %v681, 2147483648
        %v732 = vxor.u32 %v722, 2147483648
        %v733 = vxor.u32 %v724, 2147483648
        %v734 = vxor.u32 %v683, 2147483648
        %v735 = vxor.u32 %v685, 2147483648
        %v736 = vxor.u32 %v726, 2147483648
        %v737 = vxor.u32 %v728, 2147483648
        %v738 = vmul.f32 %v730, 1.442695
        %v739 = vpow.pop %v738
        %v740 = vmul.f32 %v731, 1.442695
        %v741 = vpow.pop %v740
        %v742 = vmul.f32 %v732, 1.442695
        %v743 = vpow.pop %v742
        %v744 = vmul.f32 %v733, 1.442695
        %v745 = vpow.pop %v744
        %v746 = vmul.f32 %v734, 1.442695
        %v747 = vpow.pop %v746
        %v748 = vmul.f32 %v735, 1.442695
        %v749 = vpow.pop %v748
        %v750 = vmul.f32 %v736, 1.442695
        %v751 = vpow.pop %v750
        %v752 = vmul.f32 %v737, 1.442695
        %v753 = vpow.pop %v752
        %v754 = vadd.f32 %v739, 1.0
        %v755 = vadd.f32 %v741, 1.0
        %v756 = vadd.f32 %v743, 1.0
        %v757 = vadd.f32 %v745, 1.0
        %v758 = vadd.f32 %v747, 1.0
        %v759 = vadd.f32 %v749, 1.0
        %v760 = vadd.f32 %v751, 1.0
        %v761 = vadd.f32 %v753, 1.0
        %v762 = vrcp.pop %v754
        %v763 = vmul.f32 1.0, %v762
        %v764 = vrcp.pop %v755
        %v765 = vmul.f32 1.0, %v764
        %v766 = vrcp.pop %v756
        %v767 = vmul.f32 1.0, %v766
        %v768 = vrcp.pop %v757
        %v769 = vmul.f32 1.0, %v768
        %v770 = vrcp.pop %v758
        %v771 = vmul.f32 1.0, %v770
        %v772 = vrcp.pop %v759
        %v773 = vmul.f32 1.0, %v772
        %v774 = vrcp.pop %v760
        %v775 = vmul.f32 1.0, %v774
        %v776 = vrcp.pop %v761
        %v777 = vmul.f32 1.0, %v776
        %v778 = vmul.f32 %v679, %v763
        %v779 = vmul.f32 %v681, %v765
        %v780 = vmul.f32 %v722, %v767
        %v781 = vmul.f32 %v724, %v769
        %v782 = vmul.f32 %v683, %v771
        %v783 = vmul.f32 %v685, %v773
        %v784 = vmul.f32 %v726, %v775
        %v785 = vmul.f32 %v728, %v777
        %v786 = vld [vmem:[#allocation3] sm:$0xff]
        %v787 = vld [vmem:[#allocation3 + $0x8] sm:$0xff]
        %v788 = vpack.c.bf16 %v782, %v778
        %v789 = vpack.c.bf16 %v783, %v779
        %v790 = vpack.c.bf16 %v784, %v780
        %v791 = vpack.c.bf16 %v785, %v781
        %v792 = vld [vmem:[#allocation9] sm:$0xf]
        %v793 = vld [vmem:[#allocation9 + $0x4] sm:$0xf]
        %v794 = vld [vmem:[#allocation9 + $0x8] sm:$0xf]
        %v795 = vld [vmem:[#allocation9 + $0xc] sm:$0xf]
        %v796 = vld [vmem:[#allocation9 + $0x10] sm:$0xf]
        %v797 = vld [vmem:[#allocation9 + $0x14] sm:$0xf]
        %v798 = vld [vmem:[#allocation9 + $0x18] sm:$0xf]
        %v799 = vld [vmem:[#allocation9 + $0x1c] sm:$0xf]
        %v800 = vld [vmem:[#allocation9 + $0x20] sm:$0xf]
        %v801 = vld [vmem:[#allocation9 + $0x24] sm:$0xf]
        %v802 = vld [vmem:[#allocation9 + $0x28] sm:$0xf]
        %v803 = vld [vmem:[#allocation9 + $0x2c] sm:$0xf]
        %v804 = vld [vmem:[#allocation9 + $0x30] sm:$0xf]
        %v805 = vld [vmem:[#allocation9 + $0x34] sm:$0xf]
        %v806 = vld [vmem:[#allocation9 + $0x38] sm:$0xf]
        %v807 = vld [vmem:[#allocation9 + $0x3c] sm:$0xf]
        %v808 = vld [vmem:[#allocation9 + $0x40] sm:$0xf]
        %v809 = vld [vmem:[#allocation9 + $0x44] sm:$0xf]
        %v810 = vld [vmem:[#allocation9 + $0x48] sm:$0xf]
        %v811 = vld [vmem:[#allocation9 + $0x4c] sm:$0xf]
        %v812 = vld [vmem:[#allocation9 + $0x50] sm:$0xf]
        %v813 = vld [vmem:[#allocation9 + $0x54] sm:$0xf]
        %v814 = vld [vmem:[#allocation9 + $0x58] sm:$0xf]
        %v815 = vld [vmem:[#allocation9 + $0x5c] sm:$0xf]
        %v816 = vld [vmem:[#allocation9 + $0x60] sm:$0xf]
        %v817 = vld [vmem:[#allocation9 + $0x64] sm:$0xf]
        %v818 = vld [vmem:[#allocation9 + $0x68] sm:$0xf]
        %v819 = vld [vmem:[#allocation9 + $0x6c] sm:$0xf]
        %v820 = vld [vmem:[#allocation9 + $0x70] sm:$0xf]
        %v821 = vld [vmem:[#allocation9 + $0x74] sm:$0xf]
        %v822 = vld [vmem:[#allocation9 + $0x78] sm:$0xf]
        %v823 = vld [vmem:[#allocation9 + $0x7c] sm:$0xf]
        %v824 = vld [vmem:[#allocation9 + $0x80] sm:$0xf]
        %v825 = vld [vmem:[#allocation9 + $0x84] sm:$0xf]
        %v826 = vld [vmem:[#allocation9 + $0x88] sm:$0xf]
        %v827 = vld [vmem:[#allocation9 + $0x8c] sm:$0xf]
        %v828 = vld [vmem:[#allocation9 + $0x90] sm:$0xf]
        %v829 = vld [vmem:[#allocation9 + $0x94] sm:$0xf]
        %v830 = vld [vmem:[#allocation9 + $0x98] sm:$0xf]
        %v831 = vld [vmem:[#allocation9 + $0x9c] sm:$0xf]
        %v832 = vld [vmem:[#allocation9 + $0xa0] sm:$0xf]
        %v833 = vld [vmem:[#allocation9 + $0xa4] sm:$0xf]
        %v834 = vld [vmem:[#allocation9 + $0xa8] sm:$0xf]
        %v835 = vld [vmem:[#allocation9 + $0xac] sm:$0xf]
        %v836 = vld [vmem:[#allocation9 + $0xb0] sm:$0xf]
        %v837 = vld [vmem:[#allocation9 + $0xb4] sm:$0xf]
        %v838 = vld [vmem:[#allocation9 + $0xb8] sm:$0xf]
        %v839 = vld [vmem:[#allocation9 + $0xbc] sm:$0xf]
        %v840 = vld [vmem:[#allocation9 + $0xc0] sm:$0xf]
        %v841 = vld [vmem:[#allocation9 + $0xc4] sm:$0xf]
        %v842 = vld [vmem:[#allocation9 + $0xc8] sm:$0xf]
        %v843 = vld [vmem:[#allocation9 + $0xcc] sm:$0xf]
        %v844 = vld [vmem:[#allocation9 + $0xd0] sm:$0xf]
        %v845 = vld [vmem:[#allocation9 + $0xd4] sm:$0xf]
        %v846 = vld [vmem:[#allocation9 + $0xd8] sm:$0xf]
        %v847 = vld [vmem:[#allocation9 + $0xdc] sm:$0xf]
        %v848 = vld [vmem:[#allocation9 + $0xe0] sm:$0xf]
        %v849 = vld [vmem:[#allocation9 + $0xe4] sm:$0xf]
        %v850 = vld [vmem:[#allocation9 + $0xe8] sm:$0xf]
        %v851 = vld [vmem:[#allocation9 + $0xec] sm:$0xf]
        %v852 = vld [vmem:[#allocation9 + $0xf0] sm:$0xf]
        %v853 = vld [vmem:[#allocation9 + $0xf4] sm:$0xf]
        %v854 = vld [vmem:[#allocation9 + $0xf8] sm:$0xf]
        %v855 = vld [vmem:[#allocation9 + $0xfc] sm:$0xf]
        %v920 = vunpack.c.l.b16 %v792
        %v921 = vunpack.c.l.b16 %v793
        %v922 = vunpack.c.l.b16 %v794
        %v923 = vunpack.c.l.b16 %v795
        %v924 = vunpack.c.l.b16 %v796
        %v925 = vunpack.c.l.b16 %v797
        %v926 = vunpack.c.l.b16 %v798
        %v927 = vunpack.c.l.b16 %v799
        %v928 = vunpack.c.l.b16 %v800
        %v929 = vunpack.c.l.b16 %v801
        %v930 = vunpack.c.l.b16 %v802
        %v931 = vunpack.c.l.b16 %v803
        %v932 = vunpack.c.l.b16 %v804
        %v933 = vunpack.c.l.b16 %v805
        %v934 = vunpack.c.l.b16 %v806
        %v935 = vunpack.c.l.b16 %v807
        %v936 = vunpack.c.l.b16 %v808
        %v937 = vunpack.c.l.b16 %v809
        %v938 = vunpack.c.l.b16 %v810
        %v939 = vunpack.c.l.b16 %v811
        %v940 = vunpack.c.l.b16 %v812
        %v941 = vunpack.c.l.b16 %v813
        %v942 = vunpack.c.l.b16 %v814
        %v943 = vunpack.c.l.b16 %v815
        %v944 = vunpack.c.l.b16 %v816
        %v945 = vunpack.c.l.b16 %v817
        %v946 = vunpack.c.l.b16 %v818
        %v947 = vunpack.c.l.b16 %v819
        %v948 = vunpack.c.l.b16 %v820
        %v949 = vunpack.c.l.b16 %v821
        %v950 = vunpack.c.l.b16 %v822
        %v951 = vunpack.c.l.b16 %v823
        %v952 = vunpack.c.l.b16 %v824
        %v953 = vunpack.c.l.b16 %v825
        %v954 = vunpack.c.l.b16 %v826
        %v955 = vunpack.c.l.b16 %v827
        %v956 = vunpack.c.l.b16 %v828
        %v957 = vunpack.c.l.b16 %v829
        %v958 = vunpack.c.l.b16 %v830
        %v959 = vunpack.c.l.b16 %v831
        %v960 = vunpack.c.l.b16 %v832
        %v961 = vunpack.c.l.b16 %v833
        %v962 = vunpack.c.l.b16 %v834
        %v963 = vunpack.c.l.b16 %v835
        %v964 = vunpack.c.l.b16 %v836
        %v965 = vunpack.c.l.b16 %v837
        %v966 = vunpack.c.l.b16 %v838
        %v967 = vunpack.c.l.b16 %v839
        %v968 = vunpack.c.l.b16 %v840
        %v969 = vunpack.c.l.b16 %v841
        %v970 = vunpack.c.l.b16 %v842
        %v971 = vunpack.c.l.b16 %v843
        %v972 = vunpack.c.l.b16 %v844
        %v973 = vunpack.c.l.b16 %v845
        %v974 = vunpack.c.l.b16 %v846
        %v975 = vunpack.c.l.b16 %v847
        %v976 = vunpack.c.l.b16 %v848
        %v977 = vunpack.c.l.b16 %v849
        %v978 = vunpack.c.l.b16 %v850
        %v979 = vunpack.c.l.b16 %v851
        %v980 = vunpack.c.l.b16 %v852
        %v981 = vunpack.c.l.b16 %v853
        %v982 = vunpack.c.l.b16 %v854
        %v983 = vunpack.c.l.b16 %v855
        %v984 = vpack.c.b16 %v921, %v920
        %v985 = vpack.c.b16 %v923, %v922
        %v986 = vpack.c.b16 %v925, %v924
        %v987 = vpack.c.b16 %v927, %v926
        %v988 = vpack.c.b16 %v929, %v928
        %v989 = vpack.c.b16 %v931, %v930
        %v990 = vpack.c.b16 %v933, %v932
        %v991 = vpack.c.b16 %v935, %v934
        %v992 = vpack.c.b16 %v937, %v936
        %v993 = vpack.c.b16 %v939, %v938
        %v994 = vpack.c.b16 %v941, %v940
        %v995 = vpack.c.b16 %v943, %v942
        %v996 = vpack.c.b16 %v945, %v944
        %v997 = vpack.c.b16 %v947, %v946
        %v998 = vpack.c.b16 %v949, %v948
        %v999 = vpack.c.b16 %v951, %v950
        %v1000 = vpack.c.b16 %v953, %v952
        %v1001 = vpack.c.b16 %v955, %v954
        %v1002 = vpack.c.b16 %v957, %v956
        %v1003 = vpack.c.b16 %v959, %v958
        %v1004 = vpack.c.b16 %v961, %v960
        %v1005 = vpack.c.b16 %v963, %v962
        %v1006 = vpack.c.b16 %v965, %v964
        %v1007 = vpack.c.b16 %v967, %v966
        %v1008 = vpack.c.b16 %v969, %v968
        %v1009 = vpack.c.b16 %v971, %v970
        %v1010 = vpack.c.b16 %v973, %v972
        %v1011 = vpack.c.b16 %v975, %v974
        %v1012 = vpack.c.b16 %v977, %v976
        %v1013 = vpack.c.b16 %v979, %v978
        %v1014 = vpack.c.b16 %v981, %v980
        %v1015 = vpack.c.b16 %v983, %v982
        %1048 = vmatprep.subr.bf16.mxu0 0
        %1049 = vmatpush1.bf16.msra.mxu0 %v984
        %1050 = vmatprep.subr.bf16.mxu0 0
        %1051 = vmatpush1.bf16.msra.mxu0 %v985
        %1052 = vmatprep.subr.bf16.mxu0 0
        %1053 = vmatpush1.bf16.msra.mxu0 %v986
        %1054 = vmatprep.subr.bf16.mxu0 0
        %1055 = vmatpush1.bf16.msra.mxu0 %v987
        %1056 = vmatprep.subr.bf16.mxu0 0
        %1057 = vmatpush1.bf16.msra.mxu0 %v988
        %1058 = vmatprep.subr.bf16.mxu0 0
        %1059 = vmatpush1.bf16.msra.mxu0 %v989
        %1060 = vmatprep.subr.bf16.mxu0 0
        %1061 = vmatpush1.bf16.msra.mxu0 %v990
        %1062 = vmatprep.subr.bf16.mxu0 0
        %1063 = vmatpush1.bf16.msra.mxu0 %v991
        %1064 = vmatprep.subr.bf16.mxu0 0
        %1065 = vmatpush1.bf16.msra.mxu0 %v992
        %1066 = vmatprep.subr.bf16.mxu0 0
        %1067 = vmatpush1.bf16.msra.mxu0 %v993
        %1068 = vmatprep.subr.bf16.mxu0 0
        %1069 = vmatpush1.bf16.msra.mxu0 %v994
        %1070 = vmatprep.subr.bf16.mxu0 0
        %1071 = vmatpush1.bf16.msra.mxu0 %v995
        %1072 = vmatprep.subr.bf16.mxu0 0
        %1073 = vmatpush1.bf16.msra.mxu0 %v996
        %1074 = vmatprep.subr.bf16.mxu0 0
        %1075 = vmatpush1.bf16.msra.mxu0 %v997
        %1076 = vmatprep.subr.bf16.mxu0 0
        %1077 = vmatpush1.bf16.msra.mxu0 %v998
        %1078 = vmatprep.subr.bf16.mxu0 0
        %1079 = vmatpush1.bf16.msra.mxu0 %v999
        %1080 = vmatprep.mubr.bf16.mxu0 %v789
        %1081 = vmatmul.mubr.bf16.gmra.mrb[0].mxu0 %v788
        %v1082 = vpop.f32.mrb[0].mxu0
        %v1083 = vadd.f32 0.0, %v1082
        %v1084 = vpop.f32.mrb[0].mxu0
        %v1085 = vpop.f32.mrb[0].mxu0
        %v1086 = vadd.f32 0.0, %v1085
        %v1087 = vpop.f32.mrb[0].mxu0
        %1088 = vdwg.mxu0
        %1089 = vmatprep.subr.bf16.mxu0 0
        %1090 = vmatpush1.bf16.msra.mxu0 %v1000
        %1091 = vmatprep.subr.bf16.mxu0 0
        %1092 = vmatpush1.bf16.msra.mxu0 %v1001
        %1093 = vmatprep.subr.bf16.mxu0 0
        %1094 = vmatpush1.bf16.msra.mxu0 %v1002
        %1095 = vmatprep.subr.bf16.mxu0 0
        %1096 = vmatpush1.bf16.msra.mxu0 %v1003
        %1097 = vmatprep.subr.bf16.mxu0 0
        %1098 = vmatpush1.bf16.msra.mxu0 %v1004
        %1099 = vmatprep.subr.bf16.mxu0 0
        %1100 = vmatpush1.bf16.msra.mxu0 %v1005
        %1101 = vmatprep.subr.bf16.mxu0 0
        %1102 = vmatpush1.bf16.msra.mxu0 %v1006
        %1103 = vmatprep.subr.bf16.mxu0 0
        %1104 = vmatpush1.bf16.msra.mxu0 %v1007
        %1105 = vmatprep.subr.bf16.mxu0 0
        %1106 = vmatpush1.bf16.msra.mxu0 %v1008
        %1107 = vmatprep.subr.bf16.mxu0 0
        %1108 = vmatpush1.bf16.msra.mxu0 %v1009
        %1109 = vmatprep.subr.bf16.mxu0 0
        %1110 = vmatpush1.bf16.msra.mxu0 %v1010
        %1111 = vmatprep.subr.bf16.mxu0 0
        %1112 = vmatpush1.bf16.msra.mxu0 %v1011
        %1113 = vmatprep.subr.bf16.mxu0 0
        %1114 = vmatpush1.bf16.msra.mxu0 %v1012
        %1115 = vmatprep.subr.bf16.mxu0 0
        %1116 = vmatpush1.bf16.msra.mxu0 %v1013
        %1117 = vmatprep.subr.bf16.mxu0 0
        %1118 = vmatpush1.bf16.msra.mxu0 %v1014
        %1119 = vmatprep.subr.bf16.mxu0 0
        %1120 = vmatpush1.bf16.msra.mxu0 %v1015
        %1121 = vmatprep.mubr.bf16.mxu0 %v791
        %1122 = vmatmul.mubr.bf16.gmra.mrb[0].mxu0 %v790
        %v1123 = vpop.f32.mrb[0].mxu0
        %v1124 = vadd.f32 %v1083, %v1123
        %v1125 = vpop.f32.mrb[0].mxu0
        %v1126 = vpop.f32.mrb[0].mxu0
        %v1127 = vadd.f32 %v1086, %v1126
        %v1128 = vpop.f32.mrb[0].mxu0
        %1129 = vdwg.mxu0
        %v1130 = vadd.f32 %v786, %v1124
        %v1131 = vadd.f32 %v787, %v1127
        %1132 = vst [vmem:[#allocation3] sm:$0xff] %v1130
        %1133 = vst [vmem:[#allocation3 + $0x8] sm:$0xff] %v1131
        // Predicated region
        $region65: #{tpu_custom_call.1} parent=47 // pred_check
          %p1134 = pneg %p378
        $region66: #{tpu_custom_call.1} parent=47 // pred_check_branch
          %1136 = sbr.rel (%p1134) target = $region68
        $region67: #{tpu_custom_call.1} parent=47 // pred_region
          %v1137 = vld [vmem:[#allocation3] sm:$0xff]
          %v1138 = vld [vmem:[#allocation3 + $0x8] sm:$0xff]
          %v1139 = vld [vmem:[%s6] sm:$0x1]
          %v1141 = vlaneseq
          %v1142 = vshrl.u32 %v1141, 7
          %v1143 = vsub.s32 0, %v1142
          %v1144 = vrot.slane %v1139, %v1143
          %v1146 = vadd.f32 %v1137, %v1144
          %v1147 = vadd.f32 %v1138, %v1144
          %1148 = vst [vmem:[%s367] sm:$0xff] %v1146
          %1149 = vst [vmem:[%s367 + $0x8] sm:$0xff] %v1147
        $region68: #{tpu_custom_call.1} parent=47 // pred_fallthru
          _
        %s1150 = sand.u32 %s212, 1
        %s1151 = scalar_lea.sflag [#allocation6], %s1150
        %s1152 = sand.u32 %s212, 1
        %s1153 = smul.addr %s1152, 16
        %s1154 = scalar_lea.vmem [#allocation10], %s1153
        // Predicated region
        $region69: #{tpu_custom_call.1} parent=47 // pred_check
          %p1155 = pneg %p222
        $region70: #{tpu_custom_call.1} parent=47 // pred_check_branch
          %1157 = sbr.rel (%p1155) target = $region72
        $region71: #{tpu_custom_call.1} parent=47 // pred_region
          %s1158 = smul.u32 2, %s29
          %s1160 = ssub.s32 256, 256
          %1161 = vsyncadd %s1151, %s1160
          %s1162 = smul.addr %s1158, 128
          %s1163 = scalar_lea.hbm %s7, %s1162
          %s1164 = sshll.u32 %s1154, 4
          %s1165 = int_to_ptr.vmem [resolvable:$true] %s1164
          %1170 = dma.vmem_to_hbm [thread:$0]  %s1165, 256, %s1163, %s1151, 128, 128, 8
        $region72: #{tpu_custom_call.1} parent=47 // pred_fallthru
          _
      $region48: #{tpu_custom_call.1} parent=5 // pred_fallthru
        _
      %p1171 = scmp.le.s32.totalorder 2, %s20
      // Predicated region
      $region73: #{tpu_custom_call.1} parent=5 // pred_check
        %p1172 = pneg %p1171
      $region74: #{tpu_custom_call.1} parent=5 // pred_check_branch
        %1174 = sbr.rel (%p1172) target = $region76
      $region75: #{tpu_custom_call.1} parent=5 // pred_region
        %s1175 = ssub.s32 %s20, 2
        // Predicated region
        $region77: #{tpu_custom_call.1} parent=75 // pred_check
          %p1176 = pneg %p228
        $region78: #{tpu_custom_call.1} parent=75 // pred_check_branch
          %1178 = sbr.rel (%p1176) target = $region80
        $region79: #{tpu_custom_call.1} parent=75 // pred_region
          %s1179 = sand.u32 %s213, 1
          %s1180 = scalar_lea.sflag [#allocation6], %s1179
          %s1181 = sand.u32 %s213, 1
          %s1182 = smul.addr %s1181, 16
          %s1183 = scalar_lea.vmem [#allocation10], %s1182
          %1184 = dma.done %s1180, 256
        $region80: #{tpu_custom_call.1} parent=75 // pred_fallthru
          _
      $region76: #{tpu_custom_call.1} parent=5 // pred_fallthru
        _
    $region6: #{tpu_custom_call.1} parent=1 // loop_footer
      %s24 = sadd.s32 1, %s20
    $region7: #{tpu_custom_call.1} parent=1 // loop_footer_branch
      %19 = sbr.rel target = $region3
    $region8: #{tpu_custom_call.1} parent=1 // loop_exit
      _
    %1185 = vsyncpa [#allocation5], 1
    %s1186 = scalar_lea.sflag [#allocation5], 1
    %1187 = vsyncpa %s1186, 1
    %1188 = vsyncpa [#allocation8], 1
    %1189 = vsyncpa [#allocation6], 1
    %s1190 = scalar_lea.sflag [#allocation6], 1
    %1191 = vsyncpa %s1190, 1

</llo_original>
